<compile_context>
chip_gen: v7x
topology: tpu7x:2x2x1
jax: 0.10.0
libtpu: 0.0.40
codegen_flags: <defaults>
</compile_context>

<pallas_src>
import jax
import jax.numpy as jnp
from jax.experimental import pallas as pl
from jax.experimental.pallas import tpu as pltpu


def cat_mm_kernel(x1_ref, x2t_ref, v_ref):
    # x1_ref: (TILE_M, K), x2t_ref: (1, K).  Broadcast multiply on the VPU,
    # then a K-wide cross-lane reduce on the XLU.  Accumulate in f32.
    x1 = x1_ref[...].astype(jnp.float32)
    w = x2t_ref[...].astype(jnp.float32)
    prod = x1 * w                                    # (TILE_M, K)  VPU
    v = jnp.sum(prod, axis=-1, keepdims=True)        # (TILE_M, 1)  XLU reduce
    v_ref[...] = v.astype(v_ref.dtype)


def cat_mm(x1, x2, *, tile_m=4096):
    M, K = x1.shape
    K2, N = x2.shape
    assert K == K2 and N == 1, (x1.shape, x2.shape)
    out_dtype = x1.dtype

    # (1, K) view of x2 so the kernel stays on the VPU.  For (8,1) this wrapper
    # reshape is negligible (hygiene note per review).
    x2t = x2.reshape(1, K)

    tile_m = min(tile_m, M)
    grid_m = pl.cdiv(M, tile_m)

    itemsize = jnp.dtype(out_dtype).itemsize
    cost = pl.CostEstimate(
        flops=2 * M * K,
        transcendentals=0,
        bytes_accessed=(M * K + K + M) * itemsize,
    )

    v = pl.pallas_call(
        cat_mm_kernel,
        out_shape=jax.ShapeDtypeStruct((M, 1), out_dtype),
        grid=(grid_m,),
        in_specs=[
            pl.BlockSpec((tile_m, K), lambda i: (i, 0),
                         memory_space=pltpu.MemorySpace.VMEM),
            # Constant index_map: x2t stays resident, not re-fetched per step.
            pl.BlockSpec((1, K), lambda i: (0, 0),
                         memory_space=pltpu.MemorySpace.VMEM),
        ],
        out_specs=pl.BlockSpec((tile_m, 1), lambda i: (i, 0),
                               memory_space=pltpu.MemorySpace.VMEM),
        compiler_params=pltpu.CompilerParams(
            dimension_semantics=("parallel",)),
        cost_estimate=cost,
    )(x1, x2t)

    # cat([v1, v2, v2], dim=1) with v1 == v2 == v.  Done outside the kernel so
    # the kernel writes v once (1/3 the HBM write traffic) and the duplication
    # fuses into the consumer.
    return jnp.concatenate([v, v, v], axis=1)


if __name__ == "__main__":
    key = jax.random.PRNGKey(0)
    k1, k2, k3 = jax.random.split(key, 3)

    # Literal module shapes: (1, 8) @ (8, 1) -> cat -> (1, 3).
    x1 = jax.random.normal(k1, (1, 8), dtype=jnp.float32)
    x2 = jax.random.normal(k2, (8, 1), dtype=jnp.float32)

    out = jax.block_until_ready(cat_mm(x1, x2))

    v_ref = x1 @ x2
    ref = jnp.concatenate([v_ref, v_ref, v_ref], axis=1)
    assert out.shape == (1, 3), out.shape
    assert out.dtype == x1.dtype, out.dtype
    assert jnp.allclose(out, ref, atol=1e-5, rtol=1e-5)

    # Batched path: exercises the M grid (grid_m > 1) with row tiling.
    x1b = jax.random.normal(k3, (1024, 8), dtype=jnp.float32)
    outb = jax.block_until_ready(cat_mm(x1b, x2, tile_m=256))
    vb = x1b @ x2
    refb = jnp.concatenate([vb, vb, vb], axis=1)
    assert outb.shape == (1024, 3), outb.shape
    assert jnp.allclose(outb, refb, atol=1e-5, rtol=1e-5)

    print("KERNEL_OK")
</pallas_src>

<mosaic_0001>
module attributes {stable_mosaic.version = 11 : i64} {
  func.func @cat_mm_kernel(%arg0: i32, %arg1: memref<1x8xf32, #tpu.memory_space<vmem>>, %arg2: memref<1x8xf32, #tpu.memory_space<vmem>>, %arg3: memref<1x1xf32, #tpu.memory_space<vmem>>) attributes {dimension_semantics = [#tpu.dimension_semantics<parallel>], iteration_bounds = array<i64: 1>, scalar_prefetch = 0 : i64, scratch_operands = 0 : i64, tpu.core_type = #tpu.core_type<tc>, window_params = [{transform_indices = @transform_0, window_bounds = array<i64: 1, 8>}, {pipeline_mode = #tpu.pipeline_mode<synchronous>, transform_indices = @transform_1, window_bounds = array<i64: 1, 8>}, {transform_indices = @transform_2, window_bounds = array<i64: 1, 1>}]} {
    %c0 = arith.constant 0 : index
    %c0_0 = arith.constant 0 : index
    %0 = vector.load %arg1[%c0, %c0_0] : memref<1x8xf32, #tpu.memory_space<vmem>>, vector<1x8xf32>
    %c0_1 = arith.constant 0 : index
    %c0_2 = arith.constant 0 : index
    %1 = vector.load %arg2[%c0_1, %c0_2] : memref<1x8xf32, #tpu.memory_space<vmem>>, vector<1x8xf32>
    %2 = arith.mulf %0, %1 : vector<1x8xf32>
    %cst = arith.constant dense<0.000000e+00> : vector<1xf32>
    %3 = vector.multi_reduction <add>, %2, %cst [1] : vector<1x8xf32> to vector<1xf32>
    %4 = vector.shape_cast %3 : vector<1xf32> to vector<1x1xf32>
    %c0_3 = arith.constant 0 : index
    %c0_4 = arith.constant 0 : index
    %5 = vector.load %arg3[%c0_3, %c0_4] : memref<1x1xf32, #tpu.memory_space<vmem>>, vector<1x1xf32>
    tpu.vector_store %arg3[%c0_3, %c0_4], %4 {strides = array<i32>} : memref<1x1xf32, #tpu.memory_space<vmem>>, vector<1x1xf32>,
    return
  }
  func.func @transform_0(%arg0: i32) -> (i32, i32) {
    %c0_i32 = arith.constant 0 : i32
    %c0_i32_0 = arith.constant 0 : i32
    return %arg0, %c0_i32 : i32, i32
  }
  func.func @transform_1(%arg0: i32) -> (i32, i32) {
    %c0_i32 = arith.constant 0 : i32
    %c0_i32_0 = arith.constant 0 : i32
    %c0_i32_1 = arith.constant 0 : i32
    return %c0_i32, %c0_i32_0 : i32, i32
  }
  func.func @transform_2(%arg0: i32) -> (i32, i32) {
    %c0_i32 = arith.constant 0 : i32
    %c0_i32_0 = arith.constant 0 : i32
    return %arg0, %c0_i32 : i32, i32
  }
}

</mosaic_0001>

<llo_original>
// kernel: tpu_custom_call.1
$region0: #{tpu_custom_call.1}
  #allocation0 [shape = 'u32[]', space=smem, size = 0x4, offset = 0x4, fixed_abs, tag = 'smem constant byte address 0x4 - core index']
  #allocation1 [shape = 'u32[144,128]{1,0:T(1,128)}', space=vmem, size = 0x12000, scoped, tag = 'internal scratch']
  %s0 = inlined_call_operand.hbm [shape: f32[1,8], index: 0, kind: input, shape index: {}]
  %s1 = inlined_call_operand.vmem [shape: f32[1,8], index: 1, kind: input, shape index: {}]
  %s2 = inlined_call_operand.hbm [shape: f32[1,1], index: 2, kind: output, shape index: {}]
  %s3 = sld [smem:[#allocation0]]
  $region22: #{tpu_custom_call.1} parent=0
    _
  %s5 = ssub.s32 1, %s3
  %s6 = scalar_select 0, %s5, %s3
  $region1: #{tpu_custom_call.1} parent=0
    #allocation2 [shape = 'u8[512]{0}', space=vmem, size = 0x400, scoped, tag = 'input window, operand 0, single buffered']
    #allocation3 [shape = 's32[1]{0}', space=sflag, size = 0x4, scoped, tag = 'scoped memory for tpu_custom_call.1']
    #allocation4 [shape = 's32[1]{0}', space=sflag, size = 0x4, scoped, tag = 'scoped memory for tpu_custom_call.1']
    #allocation5 [shape = 'u8[512]{0}', space=vmem, size = 0x400, scoped, tag = 'output window, operand 0, single buffered']
    %7 = vsyncpa [#allocation3], 0
    %8 = vsyncpa [#allocation4], 0
    // Predicated region
    $region2: #{tpu_custom_call.1} parent=1 // pred_check
      _
    $region3: #{tpu_custom_call.1} parent=1 // pred_check_branch
      %10 = sbr.rel (0) target = $region5
    $region4: #{tpu_custom_call.1} parent=1 // pred_region
      %s12 = ssub.s32 16, 16
      %13 = vsyncadd [#allocation3], %s12
      %s15 = sshll.u32 [#allocation2], 4
      %s16 = int_to_ptr.vmem [resolvable:$true] %s15
      %18 = dma.hbm_to_vmem [thread:$0]  %s0, 16, %s16, [#allocation3]
    $region5: #{tpu_custom_call.1} parent=1 // pred_fallthru
      _
    // Predicated region
    $region6: #{tpu_custom_call.1} parent=1 // pred_check
      _
    $region7: #{tpu_custom_call.1} parent=1 // pred_check_branch
      %20 = sbr.rel (0) target = $region9
    $region8: #{tpu_custom_call.1} parent=1 // pred_region
      _
    $region9: #{tpu_custom_call.1} parent=1 // pred_fallthru
      _
    // Predicated region
    $region10: #{tpu_custom_call.1} parent=1 // pred_check
      _
    $region11: #{tpu_custom_call.1} parent=1 // pred_check_branch
      %22 = sbr.rel (0) target = $region13
    $region12: #{tpu_custom_call.1} parent=1 // pred_region
      %23 = dma.done [#allocation3], 16
    $region13: #{tpu_custom_call.1} parent=1 // pred_fallthru
      _
    %v24 = vld [vmem:[#allocation2] sm:$0x1]
    %v25 = vld [vmem:[%s1] sm:$0x1]
    %v26 = vmul.f32 %v24, %v25
    %vm27 = vcmask 57344
    %v28 = vsel %vm27, %v26, 0.0
    %29 = vadd.xlane.f32.xlu0 %v28
    %v30 = vpop.xlane.xlu0 %29
    %vm31 = vcmask 0
    %32 = vst.msk [vmem:[#allocation5] sm:$0x1] %vm31, %v30
    // Predicated region
    $region14: #{tpu_custom_call.1} parent=1 // pred_check
      _
    $region15: #{tpu_custom_call.1} parent=1 // pred_check_branch
      %34 = sbr.rel (0) target = $region17
    $region16: #{tpu_custom_call.1} parent=1 // pred_region
      %s36 = ssub.s32 16, 16
      %37 = vsyncadd [#allocation4], %s36
      %s39 = sshll.u32 [#allocation5], 4
      %s40 = int_to_ptr.vmem [resolvable:$true] %s39
      %42 = dma.vmem_to_hbm [thread:$0]  %s40, 16, %s2, [#allocation4]
    $region17: #{tpu_custom_call.1} parent=1 // pred_fallthru
      _
    // Predicated region
    $region18: #{tpu_custom_call.1} parent=1 // pred_check
      _
    $region19: #{tpu_custom_call.1} parent=1 // pred_check_branch
      %44 = sbr.rel (0) target = $region21
    $region20: #{tpu_custom_call.1} parent=1 // pred_region
      %45 = dma.done [#allocation4], 16
    $region21: #{tpu_custom_call.1} parent=1 // pred_fallthru
      _
    %46 = vsyncpa [#allocation3], 1
    %47 = vsyncpa [#allocation4], 1

</llo_original>
